<compile_context>
chip_gen: v5e
topology: v5e:2x2
jax: 0.10.0
libtpu: 0.0.40
codegen_flags: <defaults>
</compile_context>

<pallas_src>
import functools

import jax
import jax.numpy as jnp
import numpy as np
from jax.experimental import pallas as pl
from jax.experimental.pallas import tpu as pltpu

EPS = 1e-5      # nn.BatchNorm2d default eps
LANE = 128      # TPU lane width


def _round_up(x, m):
    return (x + m - 1) // m * m


# ----------------------- Pallas kernels -----------------------

def _conv_stats_kernel(patches_ref, w_ref, pre_ref, stats_ref):
    """3x3 conv tile as a single MXU matmul (taps folded into K) plus per-tile
    BatchNorm partial sums (sum, sum-of-squares) for a later global finalize."""
    acc = jnp.dot(patches_ref[...], w_ref[...],
                  preferred_element_type=jnp.float32)          # (TM, Cp) f32
    pre_ref[...] = acc
    cp = acc.shape[1]
    s = jnp.sum(acc, axis=0, keepdims=True)                    # (1, Cp)
    sq = jnp.sum(acc * acc, axis=0, keepdims=True)             # (1, Cp)
    slab = jnp.concatenate([s, sq, jnp.zeros((6, cp), jnp.float32)], axis=0)
    stats_ref[0] = slab                                        # (8, Cp) block


def _finalize_scale_shift(stats, gamma, beta, m_rows, eps):
    """Combine per-tile partials into global batch stats; return per-channel
    (scale, shift) so BN+affine is a single fused multiply-add."""
    inv_m = 1.0 / m_rows
    tot = jnp.sum(stats, axis=0)                               # (8, Cp)
    s = tot[0:1, :]
    sq = tot[1:2, :]
    mean = s * inv_m
    var = jnp.maximum(sq * inv_m - mean * mean, 0.0)
    scale = gamma * jax.lax.rsqrt(var + eps)                   # (1, Cp)
    shift = beta - mean * scale                                # (1, Cp)
    return scale, shift


def _bn_relu_kernel(pre_ref, stats_ref, g_ref, b_ref, y_ref, *, m_rows, eps):
    """BN1 finalize + affine + ReLU; emits bf16 activation for the next conv."""
    scale, shift = _finalize_scale_shift(stats_ref[...], g_ref[...], b_ref[...],
                                         m_rows, eps)
    y = pre_ref[...] * scale + shift
    y_ref[...] = jnp.maximum(y, 0.0).astype(y_ref.dtype)


def _bn_shortcut_add_relu_kernel(pre_ref, stats_ref, xds_ref, wp_ref,
                                 g_ref, b_ref, out_ref, *, m_rows, eps):
    """BN2 finalize + affine, fused 1x1 stride-2 shortcut matmul, residual add,
    final ReLU."""
    scale, shift = _finalize_scale_shift(stats_ref[...], g_ref[...], b_ref[...],
                                         m_rows, eps)
    res = jnp.dot(xds_ref[...], wp_ref[...],
                  preferred_element_type=jnp.float32)          # (TM, Cp) f32
    y = pre_ref[...] * scale + shift + res
    out_ref[...] = jnp.maximum(y, 0.0)


# ----------------------- glue (im2col / layout) -----------------------

def _im2col_folded(x_nhwc, stride, pad):
    """x: (N, H, W, C) -> (N*Ho*Wo, 9*C) patches (kh-major, kw, c) for 3x3 conv."""
    N, H, W, C = x_nhwc.shape
    Ho = (H + 2 * pad - 3) // stride + 1
    Wo = (W + 2 * pad - 3) // stride + 1
    xp = jnp.pad(x_nhwc, ((0, 0), (pad, pad), (pad, pad), (0, 0)))
    cols = []
    for kh in range(3):
        for kw in range(3):
            sl = xp[:, kh:kh + stride * Ho:stride, kw:kw + stride * Wo:stride, :]
            cols.append(sl.reshape(N * Ho * Wo, C))
    return jnp.concatenate(cols, axis=1), (N, Ho, Wo)


def res_block_down(x_nchw, params, *, tm_target=512):
    """Forward pass of ResBlockDown. x: (N, Cin, H, W) f32 -> (N, Cout, H//2, W//2)."""
    w1, w2, wp, g1, b1, g2, b2 = params
    N, Cin, H, W = x_nchw.shape
    Cout = w1.shape[0]
    H2, W2 = H // 2, W // 2
    M = N * H2 * W2                       # rows of the im2col matrices
    Cp = _round_up(Cout, LANE)            # lane-dense output channel dim

    # --- M tiling: big enough for pipelining, padded rows are all-zero so they
    # contribute nothing to the BN partial sums (divisor stays the real M). ---
    TM = tm_target if M >= tm_target else max(8, _round_up(M, 8))
    M_pad = _round_up(M, TM)
    ntiles = M_pad // TM

    x_nhwc = jnp.transpose(x_nchw, (0, 2, 3, 1)).astype(jnp.float32)

    def pad_rows(a):
        return jnp.pad(a, ((0, M_pad - a.shape[0]), (0, 0)))

    # conv1 patches (3x3, stride 2, pad 1), taps folded into K; bf16 MXU inputs.
    patches1, _ = _im2col_folded(x_nhwc, stride=2, pad=1)        # (M, 9*Cin)
    patches1 = pad_rows(patches1).astype(jnp.bfloat16)
    # shortcut (1x1 stride-2) input rows.
    x_ds = pad_rows(x_nhwc[:, ::2, ::2, :].reshape(M, Cin)).astype(jnp.bfloat16)

    # weights -> (9*Cin_or_Cout, Cp), matching (kh, kw, c) patch column order.
    def conv_w(w):
        ci = w.shape[1]
        w2d = jnp.transpose(w, (2, 3, 1, 0)).reshape(9 * ci, Cout)
        return jnp.pad(w2d, ((0, 0), (0, Cp - Cout))).astype(jnp.bfloat16)

    w1r = conv_w(w1)                                             # (9*Cin,  Cp)
    w2r = conv_w(w2)                                             # (9*Cout, Cp)
    wpr = jnp.pad(jnp.transpose(wp[:, :, 0, 0]),
                  ((0, 0), (0, Cp - Cout))).astype(jnp.bfloat16)  # (Cin, Cp)

    def pad_ch(v):  # BN affine params; zero padding keeps padded lanes at 0.
        return jnp.pad(v.reshape(1, Cout), ((0, 0), (0, Cp - Cout))).astype(jnp.float32)

    g1r, b1r, g2r, b2r = pad_ch(g1), pad_ch(b1), pad_ch(g2), pad_ch(b2)

    cparams = pltpu.CompilerParams(
        dimension_semantics=("parallel",),        # tiles independent -> 2 TCs on v7x
        vmem_limit_bytes=48 * 1024 * 1024,        # fits v7x's 64 MiB VMEM with headroom
    )

    def row_spec(cols):
        return pl.BlockSpec((TM, cols), lambda i: (i, 0))

    def full_spec(shape):
        return pl.BlockSpec(shape, lambda i: tuple(0 for _ in shape))

    stats_out_spec = pl.BlockSpec((1, 8, Cp), lambda i: (i, 0, 0))
    stats_in_spec = pl.BlockSpec((ntiles, 8, Cp), lambda i: (0, 0, 0))

    def conv_stage(patches, wmat, k_dim):
        return pl.pallas_call(
            _conv_stats_kernel,
            grid=(ntiles,),
            in_specs=[row_spec(k_dim), full_spec((k_dim, Cp))],
            out_specs=(row_spec(Cp), stats_out_spec),
            out_shape=(jax.ShapeDtypeStruct((M_pad, Cp), jnp.float32),
                       jax.ShapeDtypeStruct((ntiles, 8, Cp), jnp.float32)),
            compiler_params=cparams,
            cost_estimate=pl.CostEstimate(
                flops=2 * M_pad * k_dim * Cp,
                transcendentals=0,
                bytes_accessed=(2 * M_pad * k_dim + 2 * k_dim * Cp
                                + 4 * M_pad * Cp + 4 * ntiles * 8 * Cp)),
        )(patches, wmat)

    # ---- conv1 + BN1 partial statistics ----
    pre1, stats1 = conv_stage(patches1, w1r, 9 * Cin)

    # ---- BN1 finalize + ReLU (bf16 activation out) ----
    y1 = pl.pallas_call(
        functools.partial(_bn_relu_kernel, m_rows=float(M), eps=EPS),
        grid=(ntiles,),
        in_specs=[row_spec(Cp), stats_in_spec,
                  full_spec((1, Cp)), full_spec((1, Cp))],
        out_specs=row_spec(Cp),
        out_shape=jax.ShapeDtypeStruct((M_pad, Cp), jnp.bfloat16),
        compiler_params=cparams,
    )(pre1, stats1, g1r, b1r)

    # conv2 patches (3x3, stride 1, pad 1) on the un-padded intermediate.
    y1_nhwc = y1[:M, :Cout].reshape(N, H2, W2, Cout)
    patches2, _ = _im2col_folded(y1_nhwc, stride=1, pad=1)       # (M, 9*Cout)
    patches2 = pad_rows(patches2).astype(jnp.bfloat16)

    # ---- conv2 + BN2 partial statistics ----
    pre2, stats2 = conv_stage(patches2, w2r, 9 * Cout)

    # ---- BN2 finalize + shortcut matmul + residual add + ReLU ----
    out = pl.pallas_call(
        functools.partial(_bn_shortcut_add_relu_kernel, m_rows=float(M), eps=EPS),
        grid=(ntiles,),
        in_specs=[row_spec(Cp), stats_in_spec, row_spec(Cin),
                  full_spec((Cin, Cp)), full_spec((1, Cp)), full_spec((1, Cp))],
        out_specs=row_spec(Cp),
        out_shape=jax.ShapeDtypeStruct((M_pad, Cp), jnp.float32),
        compiler_params=cparams,
    )(pre2, stats2, x_ds, wpr, g2r, b2r)

    out = out[:M, :Cout].reshape(N, H2, W2, Cout)
    return jnp.transpose(out, (0, 3, 1, 2))


# ----------------------- pure-JAX reference (for verification) -----------------------

def reference(x, params):
    w1, w2, wp, g1, b1, g2, b2 = params

    def conv(x, w, stride, pad):
        return jax.lax.conv_general_dilated(
            x, w, window_strides=(stride, stride),
            padding=[(pad, pad), (pad, pad)],
            dimension_numbers=("NCHW", "OIHW", "NCHW"))

    def bn(x, g, b):  # training-mode BatchNorm2d (batch stats, biased var)
        mean = x.mean(axis=(0, 2, 3), keepdims=True)
        var = ((x - mean) ** 2).mean(axis=(0, 2, 3), keepdims=True)
        return (x - mean) / jnp.sqrt(var + EPS) * g.reshape(1, -1, 1, 1) \
            + b.reshape(1, -1, 1, 1)

    res = conv(x, wp, 2, 0)
    h = jax.nn.relu(bn(conv(x, w1, 2, 1), g1, b1))
    h = bn(conv(h, w2, 1, 1), g2, b2)
    return jax.nn.relu(h + res)


# ----------------------- main -----------------------

if __name__ == "__main__":
    N, Cin, Cout, H, W = 2, 4, 8, 16, 16

    key = jax.random.PRNGKey(0)
    k = jax.random.split(key, 8)
    x = jax.random.normal(k[0], (N, Cin, H, W), jnp.float32)

    # deterministic parameter init (PyTorch OIHW conv layout, BN affine params)
    w1 = 0.30 * jax.random.normal(k[1], (Cout, Cin, 3, 3), jnp.float32)
    w2 = 0.20 * jax.random.normal(k[2], (Cout, Cout, 3, 3), jnp.float32)
    wp = 0.50 * jax.random.normal(k[3], (Cout, Cin, 1, 1), jnp.float32)
    g1 = 1.0 + 0.1 * jax.random.normal(k[4], (Cout,), jnp.float32)
    b1 = 0.1 * jax.random.normal(k[5], (Cout,), jnp.float32)
    g2 = 1.0 + 0.1 * jax.random.normal(k[6], (Cout,), jnp.float32)
    b2 = 0.1 * jax.random.normal(k[7], (Cout,), jnp.float32)
    params = (w1, w2, wp, g1, b1, g2, b2)

    out = jax.block_until_ready(res_block_down(x, params))
    ref = jax.block_until_ready(reference(x, params))

    assert out.shape == (N, Cout, H // 2, W // 2), out.shape
    np.testing.assert_allclose(np.asarray(out), np.asarray(ref),
                               rtol=2e-2, atol=2e-2)
    print("KERNEL_OK")
</pallas_src>

<mosaic_0001>
module attributes {stable_mosaic.version = 11 : i64} {
  func.func @_conv_stats_kernel(%arg0: i32, %arg1: memref<128x36xbf16, #tpu.memory_space<vmem>>, %arg2: memref<36x128xbf16, #tpu.memory_space<vmem>>, %arg3: memref<128x128xf32, #tpu.memory_space<vmem>>, %arg4: memref<1x8x128xf32, #tpu.memory_space<vmem>>) attributes {dimension_semantics = [#tpu.dimension_semantics<parallel>], iteration_bounds = array<i64: 1>, scalar_prefetch = 0 : i64, scratch_operands = 0 : i64, tpu.core_type = #tpu.core_type<tc>, window_params = [{transform_indices = @transform_0, window_bounds = array<i64: 128, 36>}, {pipeline_mode = #tpu.pipeline_mode<synchronous>, transform_indices = @transform_1, window_bounds = array<i64: 36, 128>}, {transform_indices = @transform_2, window_bounds = array<i64: 128, 128>}, {transform_indices = @transform_3, window_bounds = array<i64: 1, 8, 128>}]} {
    %c0 = arith.constant 0 : index
    %c0_0 = arith.constant 0 : index
    %0 = vector.load %arg1[%c0, %c0_0] : memref<128x36xbf16, #tpu.memory_space<vmem>>, vector<128x36xbf16>
    %c0_1 = arith.constant 0 : index
    %c0_2 = arith.constant 0 : index
    %1 = vector.load %arg2[%c0_1, %c0_2] : memref<36x128xbf16, #tpu.memory_space<vmem>>, vector<36x128xbf16>
    %cst = arith.constant dense<0.000000e+00> : vector<128x128xf32>
    %2 = tpu.matmul %0, %1, %cst {dimension_numbers = #tpu.dot_dimension_numbers<[1], [0], [0], [1], [0, 0, 1, 1], [], []>} : vector<128x36xbf16>, vector<36x128xbf16>, vector<128x128xf32> -> vector<128x128xf32>
    %c0_3 = arith.constant 0 : index
    %c0_4 = arith.constant 0 : index
    %3 = vector.load %arg3[%c0_3, %c0_4] : memref<128x128xf32, #tpu.memory_space<vmem>>, vector<128x128xf32>
    tpu.vector_store %arg3[%c0_3, %c0_4], %2 {strides = array<i32>} : memref<128x128xf32, #tpu.memory_space<vmem>>, vector<128x128xf32>,
    %cst_5 = arith.constant dense<0.000000e+00> : vector<128xf32>
    %4 = vector.multi_reduction <add>, %2, %cst_5 [0] : vector<128x128xf32> to vector<128xf32>
    %5 = vector.shape_cast %4 : vector<128xf32> to vector<1x128xf32>
    %6 = arith.mulf %2, %2 : vector<128x128xf32>
    %cst_6 = arith.constant dense<0.000000e+00> : vector<128xf32>
    %7 = vector.multi_reduction <add>, %6, %cst_6 [0] : vector<128x128xf32> to vector<128xf32>
    %8 = vector.shape_cast %7 : vector<128xf32> to vector<1x128xf32>
    %cst_7 = arith.constant 0.000000e+00 : f32
    %9 = vector.broadcast %cst_7 : f32 to vector<6x128xf32>
    %10 = tpu.concatenate %5, %8, %9 in 0 : vector<1x128xf32>, vector<1x128xf32>, vector<6x128xf32> -> vector<8x128xf32>
    %c0_8 = arith.constant 0 : index
    %c0_9 = arith.constant 0 : index
    %c0_10 = arith.constant 0 : index
    %11 = vector.load %arg4[%c0_8, %c0_9, %c0_10] : memref<1x8x128xf32, #tpu.memory_space<vmem>>, vector<1x8x128xf32>
    %12 = vector.shape_cast %11 : vector<1x8x128xf32> to vector<8x128xf32>
    %13 = vector.shape_cast %10 : vector<8x128xf32> to vector<1x8x128xf32>
    tpu.vector_store %arg4[%c0_8, %c0_9, %c0_10], %13 {strides = array<i32>} : memref<1x8x128xf32, #tpu.memory_space<vmem>>, vector<1x8x128xf32>,
    return
  }
  func.func @transform_0(%arg0: i32) -> (i32, i32) {
    %c0_i32 = arith.constant 0 : i32
    %c0_i32_0 = arith.constant 0 : i32
    return %arg0, %c0_i32 : i32, i32
  }
  func.func @transform_1(%arg0: i32) -> (i32, i32) {
    %c0_i32 = arith.constant 0 : i32
    %c0_i32_0 = arith.constant 0 : i32
    %c0_i32_1 = arith.constant 0 : i32
    return %c0_i32, %c0_i32_0 : i32, i32
  }
  func.func @transform_2(%arg0: i32) -> (i32, i32) {
    %c0_i32 = arith.constant 0 : i32
    %c0_i32_0 = arith.constant 0 : i32
    return %arg0, %c0_i32 : i32, i32
  }
  func.func @transform_3(%arg0: i32) -> (i32, i32, i32) {
    %c0_i32 = arith.constant 0 : i32
    %c0_i32_0 = arith.constant 0 : i32
    %c0_i32_1 = arith.constant 0 : i32
    return %arg0, %c0_i32, %c0_i32_0 : i32, i32, i32
  }
}

</mosaic_0001>

<llo_original>
// kernel: tpu_custom_call.1
$region0: #{tpu_custom_call.1}
  #allocation0 [shape = 'u32[]', space=smem, size = 0x4, offset = 0x4, fixed_abs, tag = 'smem constant byte address 0x4 - core index']
  #allocation1 [shape = 'u32[72,128]{1,0:T(1,128)}', space=vmem, size = 0x9000, scoped, tag = 'internal scratch']
  %s0 = inlined_call_operand.vmem [shape: bf16[128,36], index: 0, kind: input, shape index: {}]
  %s1 = inlined_call_operand.vmem [shape: bf16[36,128], index: 1, kind: input, shape index: {}]
  %s2 = inlined_call_operand.hbm [shape: f32[128,128], index: 2, kind: output, shape index: {0}]
  %s3 = inlined_call_operand.hbm [shape: f32[1,8,128], index: 3, kind: output, shape index: {1}]
  %4 = xla_tuple %s2, %s3
  %s5 = sld [smem:[#allocation0]]
  $region26: #{tpu_custom_call.1} parent=0
    _
  %s7 = ssub.s32 1, %s5
  %s8 = scalar_select 0, %s7, %s5
  $region1: #{tpu_custom_call.1} parent=0
    #allocation2 [shape = 'u8[65536]{0}', space=vmem, size = 0x10000, scoped, tag = 'output window, operand 0, single buffered']
    #allocation3 [shape = 's32[1]{0}', space=sflag, size = 0x4, scoped, tag = 'scoped memory for tpu_custom_call.1']
    #allocation4 [shape = 'u8[4096]{0}', space=vmem, size = 0x1000, scoped, tag = 'output window, operand 1, single buffered']
    #allocation5 [shape = 's32[1]{0}', space=sflag, size = 0x4, scoped, tag = 'scoped memory for tpu_custom_call.1']
    %9 = vsyncpa [#allocation3], 0
    %10 = vsyncpa [#allocation5], 0
    // Predicated region
    $region2: #{tpu_custom_call.1} parent=1 // pred_check
      _
    $region3: #{tpu_custom_call.1} parent=1 // pred_check_branch
      %12 = sbr.rel (0) target = $region5
    $region4: #{tpu_custom_call.1} parent=1 // pred_region
      _
    $region5: #{tpu_custom_call.1} parent=1 // pred_fallthru
      _
    // Predicated region
    $region6: #{tpu_custom_call.1} parent=1 // pred_check
      _
    $region7: #{tpu_custom_call.1} parent=1 // pred_check_branch
      %14 = sbr.rel (0) target = $region9
    $region8: #{tpu_custom_call.1} parent=1 // pred_region
      _
    $region9: #{tpu_custom_call.1} parent=1 // pred_fallthru
      _
    %v16 = vld [vmem:[%s0] sm:$0xf]
    %v17 = vld [vmem:[%s0 + $0x4] sm:$0xf]
    %v18 = vld [vmem:[%s0 + $0x8] sm:$0xf]
    %v19 = vld [vmem:[%s0 + $0xc] sm:$0xf]
    %v20 = vld [vmem:[%s0 + $0x10] sm:$0xf]
    %v21 = vld [vmem:[%s0 + $0x14] sm:$0xf]
    %v22 = vld [vmem:[%s0 + $0x18] sm:$0xf]
    %v23 = vld [vmem:[%s0 + $0x1c] sm:$0xf]
    %v24 = vld [vmem:[%s0 + $0x20] sm:$0xf]
    %v25 = vld [vmem:[%s0 + $0x24] sm:$0xf]
    %v26 = vld [vmem:[%s0 + $0x28] sm:$0xf]
    %v27 = vld [vmem:[%s0 + $0x2c] sm:$0xf]
    %v28 = vld [vmem:[%s0 + $0x30] sm:$0xf]
    %v29 = vld [vmem:[%s0 + $0x34] sm:$0xf]
    %v30 = vld [vmem:[%s0 + $0x38] sm:$0xf]
    %v31 = vld [vmem:[%s0 + $0x3c] sm:$0xf]
    %v32 = vld [vmem:[%s1] sm:$0xf]
    %v33 = vld [vmem:[%s1 + $0x4] sm:$0xf]
    %v34 = vld [vmem:[%s1 + $0x8] sm:$0xf]
    %v35 = vld [vmem:[%s1 + $0xc] sm:$0xf]
    %v36 = vld [vmem:[%s1 + $0x10] sm:$0x3]
    %v53 = vunpack.c.l.b16 %v16
    %v54 = vunpack.c.l.b16 %v17
    %v55 = vunpack.c.l.b16 %v18
    %v56 = vunpack.c.l.b16 %v19
    %v57 = vunpack.c.l.b16 %v20
    %v58 = vunpack.c.l.b16 %v21
    %v59 = vunpack.c.l.b16 %v22
    %v60 = vunpack.c.l.b16 %v23
    %v61 = vunpack.c.l.b16 %v24
    %v62 = vunpack.c.l.b16 %v25
    %v63 = vunpack.c.l.b16 %v26
    %v64 = vunpack.c.l.b16 %v27
    %v65 = vunpack.c.l.b16 %v28
    %v66 = vunpack.c.l.b16 %v29
    %v67 = vunpack.c.l.b16 %v30
    %v68 = vunpack.c.l.b16 %v31
    %v69 = vpack.c.b16 %v54, %v53
    %v70 = vpack.c.b16 %v56, %v55
    %v71 = vpack.c.b16 %v58, %v57
    %v72 = vpack.c.b16 %v60, %v59
    %v73 = vpack.c.b16 %v62, %v61
    %v74 = vpack.c.b16 %v64, %v63
    %v75 = vpack.c.b16 %v66, %v65
    %v76 = vpack.c.b16 %v68, %v67
    %v82 = vunpack.c.l.b16 %v32
    %v83 = vunpack.c.l.b16 %v33
    %v84 = vunpack.c.l.b16 %v34
    %v85 = vunpack.c.l.b16 %v35
    %v86 = vunpack.c.l.b16 %v36
    %v87 = vpack.c.b16 %v83, %v82
    %v88 = vpack.c.b16 %v85, %v84
    %v89 = vpack.c.b16 %v86, %v86
    %vm92 = vcmask 293888
    %v94 = vsel %vm92, %v69, 0
    %v97 = vsel %vm92, %v70, 0
    %v100 = vsel %vm92, %v71, 0
    %v103 = vsel %vm92, %v72, 0
    %v106 = vsel %vm92, %v73, 0
    %v109 = vsel %vm92, %v74, 0
    %v112 = vsel %vm92, %v75, 0
    %v115 = vsel %vm92, %v76, 0
    %vm117 = vcmask 1041408
    %v119 = vsel %vm117, %v89, 0
    %121 = vmatpush.bf16.msra.mxu0 0
    %122 = vmatpush.bf16.msra.mxu0 0
    %123 = vmatpush.bf16.msra.mxu0 0
    %124 = vmatpush.bf16.msra.mxu0 0
    %125 = vmatpush.bf16.msra.mxu0 0
    %126 = vmatpush.bf16.msra.mxu0 %v119
    %127 = vmatpush.bf16.msra.mxu0 %v88
    %128 = vmatpush.bf16.msra.mxu0 %v87
    %129 = vmatmul.bf16.gmra.mxu0 %v94
    %v130 = vpop.f32.mrf.mxu0
    %v131 = vadd.f32 0.0, %v130
    %v132 = vpop.f32.mrf.mxu0
    %v133 = vadd.f32 0.0, %v132
    %134 = vmatmul.bf16.gmra.mxu0 %v97
    %v135 = vpop.f32.mrf.mxu0
    %v136 = vadd.f32 0.0, %v135
    %v137 = vpop.f32.mrf.mxu0
    %v138 = vadd.f32 0.0, %v137
    %139 = vmatmul.bf16.gmra.mxu0 %v100
    %v140 = vpop.f32.mrf.mxu0
    %v141 = vadd.f32 0.0, %v140
    %v142 = vpop.f32.mrf.mxu0
    %v143 = vadd.f32 0.0, %v142
    %144 = vmatmul.bf16.gmra.mxu0 %v103
    %v145 = vpop.f32.mrf.mxu0
    %v146 = vadd.f32 0.0, %v145
    %v147 = vpop.f32.mrf.mxu0
    %v148 = vadd.f32 0.0, %v147
    %149 = vmatmul.bf16.gmra.mxu0 %v106
    %v150 = vpop.f32.mrf.mxu0
    %v151 = vadd.f32 0.0, %v150
    %v152 = vpop.f32.mrf.mxu0
    %v153 = vadd.f32 0.0, %v152
    %154 = vmatmul.bf16.gmra.mxu0 %v109
    %v155 = vpop.f32.mrf.mxu0
    %v156 = vadd.f32 0.0, %v155
    %v157 = vpop.f32.mrf.mxu0
    %v158 = vadd.f32 0.0, %v157
    %159 = vmatmul.bf16.gmra.mxu0 %v112
    %v160 = vpop.f32.mrf.mxu0
    %v161 = vadd.f32 0.0, %v160
    %v162 = vpop.f32.mrf.mxu0
    %v163 = vadd.f32 0.0, %v162
    %164 = vmatmul.bf16.gmra.mxu0 %v115
    %v165 = vpop.f32.mrf.mxu0
    %v166 = vadd.f32 0.0, %v165
    %v167 = vpop.f32.mrf.mxu0
    %v168 = vadd.f32 0.0, %v167
    %169 = vdwg.mxu0
    %170 = vst [vmem:[#allocation2] sm:$0xff] %v131
    %171 = vst [vmem:[#allocation2 + $0x8] sm:$0xff] %v133
    %172 = vst [vmem:[#allocation2 + $0x10] sm:$0xff] %v136
    %173 = vst [vmem:[#allocation2 + $0x18] sm:$0xff] %v138
    %174 = vst [vmem:[#allocation2 + $0x20] sm:$0xff] %v141
    %175 = vst [vmem:[#allocation2 + $0x28] sm:$0xff] %v143
    %176 = vst [vmem:[#allocation2 + $0x30] sm:$0xff] %v146
    %177 = vst [vmem:[#allocation2 + $0x38] sm:$0xff] %v148
    %178 = vst [vmem:[#allocation2 + $0x40] sm:$0xff] %v151
    %179 = vst [vmem:[#allocation2 + $0x48] sm:$0xff] %v153
    %180 = vst [vmem:[#allocation2 + $0x50] sm:$0xff] %v156
    %181 = vst [vmem:[#allocation2 + $0x58] sm:$0xff] %v158
    %182 = vst [vmem:[#allocation2 + $0x60] sm:$0xff] %v161
    %183 = vst [vmem:[#allocation2 + $0x68] sm:$0xff] %v163
    %184 = vst [vmem:[#allocation2 + $0x70] sm:$0xff] %v166
    %185 = vst [vmem:[#allocation2 + $0x78] sm:$0xff] %v168
    %v186 = vadd.f32 %v131, %v133
    %v187 = vadd.f32 %v186, %v136
    %v188 = vadd.f32 %v187, %v138
    %v189 = vadd.f32 %v188, %v141
    %v190 = vadd.f32 %v189, %v143
    %v191 = vadd.f32 %v190, %v146
    %v192 = vadd.f32 %v191, %v148
    %v193 = vadd.f32 %v192, %v151
    %v194 = vadd.f32 %v193, %v153
    %v195 = vadd.f32 %v194, %v156
    %v196 = vadd.f32 %v195, %v158
    %v197 = vadd.f32 %v196, %v161
    %v198 = vadd.f32 %v197, %v163
    %v199 = vadd.f32 %v198, %v166
    %v200 = vadd.f32 %v199, %v168
    %v201 = vrot.slane %v200, 4
    %v202 = vadd.f32 %v200, %v201
    %v203 = vrot.slane %v202, 2
    %v204 = vadd.f32 %v202, %v203
    %v205 = vrot.slane %v204, 1
    %v206 = vadd.f32 %v204, %v205
    %v207 = vmul.f32 %v131, %v131
    %v208 = vmul.f32 %v133, %v133
    %v209 = vmul.f32 %v136, %v136
    %v210 = vmul.f32 %v138, %v138
    %v211 = vmul.f32 %v141, %v141
    %v212 = vmul.f32 %v143, %v143
    %v213 = vmul.f32 %v146, %v146
    %v214 = vmul.f32 %v148, %v148
    %v215 = vmul.f32 %v151, %v151
    %v216 = vmul.f32 %v153, %v153
    %v217 = vmul.f32 %v156, %v156
    %v218 = vmul.f32 %v158, %v158
    %v219 = vmul.f32 %v161, %v161
    %v220 = vmul.f32 %v163, %v163
    %v221 = vmul.f32 %v166, %v166
    %v222 = vmul.f32 %v168, %v168
    %v223 = vadd.f32 %v207, %v208
    %v224 = vadd.f32 %v223, %v209
    %v225 = vadd.f32 %v224, %v210
    %v226 = vadd.f32 %v225, %v211
    %v227 = vadd.f32 %v226, %v212
    %v228 = vadd.f32 %v227, %v213
    %v229 = vadd.f32 %v228, %v214
    %v230 = vadd.f32 %v229, %v215
    %v231 = vadd.f32 %v230, %v216
    %v232 = vadd.f32 %v231, %v217
    %v233 = vadd.f32 %v232, %v218
    %v234 = vadd.f32 %v233, %v219
    %v235 = vadd.f32 %v234, %v220
    %v236 = vadd.f32 %v235, %v221
    %v237 = vadd.f32 %v236, %v222
    %v238 = vrot.slane %v237, 4
    %v239 = vadd.f32 %v237, %v238
    %v240 = vrot.slane %v239, 2
    %v241 = vadd.f32 %v239, %v240
    %v242 = vrot.slane %v241, 1
    %v243 = vadd.f32 %v241, %v242
    %vm244 = vcmask 1040384
    %v245 = vsel %vm244, %v206, %v243
    %v246 = vsel %vm117, %v245, 0.0
    %247 = vst [vmem:[#allocation4] sm:$0xff] %v246
    // Predicated region
    $region10: #{tpu_custom_call.1} parent=1 // pred_check
      _
    $region11: #{tpu_custom_call.1} parent=1 // pred_check_branch
      %249 = sbr.rel (0) target = $region13
    $region12: #{tpu_custom_call.1} parent=1 // pred_region
      %251 = vsyncadd [#allocation3], 0
      %s252 = sshll.u32 [#allocation2], 4
      %s253 = int_to_ptr.vmem [resolvable:$true] %s252
      %s254 = sshll.u32 %s2, 4
      %s255 = int_to_ptr.hbm [resolvable:$true] %s254
      %260 = dma.vmem_to_hbm [thread:$0]  %s253, 2048, %s255, [#allocation3], 128, 128, 8
    $region13: #{tpu_custom_call.1} parent=1 // pred_fallthru
      _
    // Predicated region
    $region14: #{tpu_custom_call.1} parent=1 // pred_check
      _
    $region15: #{tpu_custom_call.1} parent=1 // pred_check_branch
      %262 = sbr.rel (0) target = $region17
    $region16: #{tpu_custom_call.1} parent=1 // pred_region
      %264 = vsyncadd [#allocation5], 0
      %s266 = sshll.u32 [#allocation4], 4
      %s267 = int_to_ptr.vmem [resolvable:$true] %s266
      %s268 = sshll.u32 %s3, 4
      %s269 = int_to_ptr.hbm [resolvable:$true] %s268
      %271 = dma.vmem_to_hbm [thread:$0]  %s267, 128, %s269, [#allocation5]
    $region17: #{tpu_custom_call.1} parent=1 // pred_fallthru
      _
    // Predicated region
    $region18: #{tpu_custom_call.1} parent=1 // pred_check
      _
    $region19: #{tpu_custom_call.1} parent=1 // pred_check_branch
      %273 = sbr.rel (0) target = $region21
    $region20: #{tpu_custom_call.1} parent=1 // pred_region
      %275 = dma.done [#allocation3], 2048
    $region21: #{tpu_custom_call.1} parent=1 // pred_fallthru
      _
    // Predicated region
    $region22: #{tpu_custom_call.1} parent=1 // pred_check
      _
    $region23: #{tpu_custom_call.1} parent=1 // pred_check_branch
      %277 = sbr.rel (0) target = $region25
    $region24: #{tpu_custom_call.1} parent=1 // pred_region
      %279 = dma.done [#allocation5], 128
    $region25: #{tpu_custom_call.1} parent=1 // pred_fallthru
      _
    %280 = vsyncpa [#allocation3], 1
    %281 = vsyncpa [#allocation5], 1

</llo_original>
